<compile_context>
chip_gen: v6e
topology: v6e:2x2x1
jax: 0.10.0
libtpu: 0.0.40
codegen_flags: <defaults>
</compile_context>

<pallas_src>
import functools

import jax
import jax.numpy as jnp
from jax.experimental import pallas as pl
from jax.experimental.pallas import tpu as pltpu

ALPHA = 0.1      # self.alpha (float -> sample_alpha() returns it unchanged)
BN_EPS = 1e-5    # torch.nn.BatchNorm1d default eps


def direction_kernel(z_ref, c_ref, out_ref, *, k, size):
    # z_ref  : [B, S]                      latent codes
    # c_ref  : [S + 8 + 2*k*S, k*S]        packed constants (rows, lane-dense):
    #            [0        : S        ]   W1 packed on lanes        [S,  k*S]
    #            [S        : S+8      ]   b1 / gamma / beta / zeros [8,  k*S]
    #            [S+8      : S+8+k*S  ]   block-diagonal W2         [k*S, k*S]
    #            [S+8+k*S  : S+8+2k*S ]   block-diagonal ones mask  [k*S, k*S]
    # out_ref: [B, k*S]                    lane-dense output slab
    S = size
    KS = k * S

    z = z_ref[...].astype(jnp.float32)                       # [B, S]

    # Static, sublane-aligned row slices of the constant slab (offsets 0, S, S+8, ...).
    w1 = c_ref[0:S, :]                                        # [S, KS]
    p = c_ref[S:S + 8, :]                                     # [8, KS] aligned load
    w2 = c_ref[S + 8:S + 8 + KS, :]                           # [KS, KS]
    mask = c_ref[S + 8 + KS:S + 8 + 2 * KS, :]                # [KS, KS]

    b1 = p[0:1, :]                                            # keep 2-D -> sublane bcast
    gamma = p[1:2, :]
    beta = p[2:3, :]

    # linear_1 for all k directions in one MXU pass: [B,S] @ [S,k*S]
    h = jnp.dot(z, w1, preferred_element_type=jnp.float32) + b1

    # batchnorm_1 (training-mode batch stats per column == per (direction, feature)),
    # two-pass variance for robustness; fold gamma*rsqrt into one scale.
    mean = jnp.mean(h, axis=0, keepdims=True)
    hc = h - mean
    var = jnp.mean(hc * hc, axis=0, keepdims=True)
    h = hc * (gamma * jax.lax.rsqrt(var + BN_EPS)) + beta

    # relu_1
    h = jnp.maximum(h, 0.0)

    # linear_2 (no bias), block-diagonal so directions stay independent: [B,KS]@[KS,KS]
    dz = jnp.dot(h, w2, preferred_element_type=jnp.float32)

    # post_process: per-(row, direction) L2 normalization via the precomputed
    # block-diagonal ones matmul (stays on the MXU, lane-dense), fused with ALPHA.
    sumsq = jnp.dot(dz * dz, mask, preferred_element_type=jnp.float32)
    dz = dz * (ALPHA * jax.lax.rsqrt(sumsq))

    # residual: tile z along lanes in-kernel (no extra input DMA / HBM materialization)
    zt = jnp.concatenate([z] * k, axis=1)                     # [B, KS]
    out_ref[...] = (zt + dz).astype(out_ref.dtype)


def pack_constants(w1, b1, gamma, beta, w2):
    """Pack all weights into one lane-dense f32 slab. Run ONCE per weight update."""
    k, S, _ = w1.shape
    KS = k * S
    w1p = jnp.transpose(w1, (1, 0, 2)).reshape(S, KS).astype(jnp.float32)   # [S, k*S]
    params = jnp.zeros((8, KS), jnp.float32)                                # 8-row aligned
    params = params.at[0].set(b1.reshape(KS))
    params = params.at[1].set(gamma.reshape(KS))
    params = params.at[2].set(beta.reshape(KS))
    w2bd = jax.scipy.linalg.block_diag(*[w2[i] for i in range(k)]).astype(jnp.float32)
    mask = jax.scipy.linalg.block_diag(*([jnp.ones((S, S), jnp.float32)] * k))
    return jnp.concatenate([w1p, params, w2bd, mask], axis=0)               # [S+8+2KS, KS]


@functools.partial(jax.jit, static_argnames=("k", "size"))
def direction_model_packed(z, const_slab, *, k, size):
    """z: [B, size]; const_slab from pack_constants(). Returns [k*B, size]."""
    B = z.shape[0]
    KS = k * size
    rows = const_slab.shape[0]

    out = pl.pallas_call(
        functools.partial(direction_kernel, k=k, size=size),
        out_shape=jax.ShapeDtypeStruct((B, KS), jnp.float32),
        grid_spec=pltpu.PrefetchScalarGridSpec(
            num_scalar_prefetch=0,
            grid=(1,),
            in_specs=[
                pl.BlockSpec((B, size), lambda i: (0, 0)),    # z
                pl.BlockSpec((rows, KS), lambda i: (0, 0)),   # packed constants
            ],
            out_specs=pl.BlockSpec((B, KS), lambda i: (0, 0)),
        ),
        compiler_params=pltpu.CompilerParams(dimension_semantics=("arbitrary",)),
    )(z, const_slab)

    # Lane-dense [B, k*S] -> [k, B, S] -> [k*B, S] (wrapper-side layout plumbing,
    # matches torch.reshape(z + dz, [-1, size])).
    return out.reshape(B, k, size).transpose(1, 0, 2).reshape(k * B, size)


def direction_model(z, w1, b1, gamma, beta, w2):
    """Convenience wrapper: pack + run. For repeated forwards, call pack_constants once."""
    k, S, _ = w1.shape
    return direction_model_packed(z, pack_constants(w1, b1, gamma, beta, w2), k=k, size=S)


def reference(z, w1, b1, gamma, beta, w2):
    outs = []
    for i in range(w1.shape[0]):
        h = z @ w1[i] + b1[i, 0]
        mean = h.mean(axis=0)
        var = ((h - mean) ** 2).mean(axis=0)
        h = (h - mean) / jnp.sqrt(var + BN_EPS) * gamma[i, 0] + beta[i, 0]
        h = jnp.maximum(h, 0.0)
        dz = h @ w2[i]
        dz = dz / jnp.linalg.norm(dz, axis=1, keepdims=True)
        outs.append(z + ALPHA * dz)
    return jnp.stack(outs).reshape(-1, z.shape[-1])


if __name__ == "__main__":
    K, B, S = 4, 8, 32  # k directions, batch of latent codes, latent size (depth=2 MLP)

    key = jax.random.PRNGKey(0)
    kz, kw1, kb1, kg, kbt, kw2 = jax.random.split(key, 6)

    z = jax.random.normal(kz, (B, S), dtype=jnp.float32)
    w1 = jax.random.normal(kw1, (K, S, S), dtype=jnp.float32) * 0.1
    b1 = jax.random.normal(kb1, (K, 1, S), dtype=jnp.float32) * 0.1
    gamma = 1.0 + 0.1 * jax.random.normal(kg, (K, 1, S), dtype=jnp.float32)
    beta = 0.1 * jax.random.normal(kbt, (K, 1, S), dtype=jnp.float32)
    w2 = jax.random.normal(kw2, (K, S, S), dtype=jnp.float32) * 0.1

    const_slab = pack_constants(w1, b1, gamma, beta, w2)   # once per weight update
    out = direction_model_packed(z, const_slab, k=K, size=S)
    jax.block_until_ready(out)

    ref = reference(z, w1, b1, gamma, beta, w2)
    assert out.shape == (K * B, S), out.shape
    assert jnp.allclose(out, ref, atol=1e-4, rtol=1e-4), float(jnp.max(jnp.abs(out - ref)))

    print("KERNEL_OK")
</pallas_src>

<mosaic_0001>
module attributes {stable_mosaic.version = 11 : i64} {
  func.func @direction_kernel(%arg0: i32, %arg1: memref<8x32xf32, #tpu.memory_space<vmem>>, %arg2: memref<296x128xf32, #tpu.memory_space<vmem>>, %arg3: memref<8x128xf32, #tpu.memory_space<vmem>>) attributes {dimension_semantics = [#tpu.dimension_semantics<arbitrary>], iteration_bounds = array<i64: 1>, scalar_prefetch = 0 : i64, scratch_operands = 0 : i64, tpu.core_type = #tpu.core_type<tc>, window_params = [{pipeline_mode = #tpu.pipeline_mode<synchronous>, transform_indices = @transform_0, window_bounds = array<i64: 8, 32>}, {pipeline_mode = #tpu.pipeline_mode<synchronous>, transform_indices = @transform_1, window_bounds = array<i64: 296, 128>}, {pipeline_mode = #tpu.pipeline_mode<synchronous>, transform_indices = @transform_2, window_bounds = array<i64: 8, 128>}]} {
    %c0 = arith.constant 0 : index
    %c0_0 = arith.constant 0 : index
    %0 = vector.load %arg1[%c0, %c0_0] : memref<8x32xf32, #tpu.memory_space<vmem>>, vector<8x32xf32>
    %c0_1 = arith.constant 0 : index
    %c0_2 = arith.constant 0 : index
    %1 = vector.load %arg2[%c0_1, %c0_2] : memref<296x128xf32, #tpu.memory_space<vmem>>, vector<32x128xf32>
    %c32 = arith.constant 32 : index
    %c0_3 = arith.constant 0 : index
    %2 = vector.load %arg2[%c32, %c0_3] : memref<296x128xf32, #tpu.memory_space<vmem>>, vector<8x128xf32>
    %c40 = arith.constant 40 : index
    %c0_4 = arith.constant 0 : index
    %3 = vector.load %arg2[%c40, %c0_4] : memref<296x128xf32, #tpu.memory_space<vmem>>, vector<128x128xf32>
    %c168 = arith.constant 168 : index
    %c0_5 = arith.constant 0 : index
    %4 = vector.load %arg2[%c168, %c0_5] : memref<296x128xf32, #tpu.memory_space<vmem>>, vector<128x128xf32>
    %5 = vector.extract_strided_slice %2 {offsets = [0, 0], sizes = [1, 128], strides = [1, 1]} : vector<8x128xf32> to vector<1x128xf32>
    %6 = vector.extract_strided_slice %2 {offsets = [1, 0], sizes = [1, 128], strides = [1, 1]} : vector<8x128xf32> to vector<1x128xf32>
    %7 = vector.extract_strided_slice %2 {offsets = [2, 0], sizes = [1, 128], strides = [1, 1]} : vector<8x128xf32> to vector<1x128xf32>
    %cst = arith.constant dense<0.000000e+00> : vector<8x128xf32>
    %8 = tpu.matmul %0, %1, %cst {dimension_numbers = #tpu.dot_dimension_numbers<[1], [0], [0], [1], [0, 0, 1, 1], [], []>} : vector<8x32xf32>, vector<32x128xf32>, vector<8x128xf32> -> vector<8x128xf32>
    %9 = vector.broadcast %5 : vector<1x128xf32> to vector<8x128xf32>
    %10 = arith.addf %8, %9 : vector<8x128xf32>
    %cst_6 = arith.constant dense<0.000000e+00> : vector<128xf32>
    %11 = vector.multi_reduction <add>, %10, %cst_6 [0] : vector<8x128xf32> to vector<128xf32>
    %12 = vector.shape_cast %11 : vector<128xf32> to vector<1x128xf32>
    %cst_7 = arith.constant 8.000000e+00 : f32
    %13 = vector.broadcast %cst_7 : f32 to vector<1x128xf32>
    %14 = arith.divf %12, %13 : vector<1x128xf32>
    %15 = vector.broadcast %14 : vector<1x128xf32> to vector<8x128xf32>
    %16 = arith.subf %10, %15 : vector<8x128xf32>
    %17 = arith.mulf %16, %16 : vector<8x128xf32>
    %cst_8 = arith.constant dense<0.000000e+00> : vector<128xf32>
    %18 = vector.multi_reduction <add>, %17, %cst_8 [0] : vector<8x128xf32> to vector<128xf32>
    %19 = vector.shape_cast %18 : vector<128xf32> to vector<1x128xf32>
    %cst_9 = arith.constant 8.000000e+00 : f32
    %20 = vector.broadcast %cst_9 : f32 to vector<1x128xf32>
    %21 = arith.divf %19, %20 : vector<1x128xf32>
    %cst_10 = arith.constant 9.99999974E-6 : f32
    %22 = vector.broadcast %cst_10 : f32 to vector<1x128xf32>
    %23 = arith.addf %21, %22 : vector<1x128xf32>
    %24 = math.rsqrt %23 : vector<1x128xf32>
    %25 = arith.mulf %6, %24 : vector<1x128xf32>
    %26 = vector.broadcast %25 : vector<1x128xf32> to vector<8x128xf32>
    %27 = arith.mulf %16, %26 : vector<8x128xf32>
    %28 = vector.broadcast %7 : vector<1x128xf32> to vector<8x128xf32>
    %29 = arith.addf %27, %28 : vector<8x128xf32>
    %cst_11 = arith.constant 0.000000e+00 : f32
    %30 = vector.broadcast %cst_11 : f32 to vector<8x128xf32>
    %31 = arith.maximumf %29, %30 : vector<8x128xf32>
    %cst_12 = arith.constant dense<0.000000e+00> : vector<8x128xf32>
    %32 = tpu.matmul %31, %3, %cst_12 {dimension_numbers = #tpu.dot_dimension_numbers<[1], [0], [0], [1], [0, 0, 1, 1], [], []>} : vector<8x128xf32>, vector<128x128xf32>, vector<8x128xf32> -> vector<8x128xf32>
    %33 = arith.mulf %32, %32 : vector<8x128xf32>
    %cst_13 = arith.constant dense<0.000000e+00> : vector<8x128xf32>
    %34 = tpu.matmul %33, %4, %cst_13 {dimension_numbers = #tpu.dot_dimension_numbers<[1], [0], [0], [1], [0, 0, 1, 1], [], []>} : vector<8x128xf32>, vector<128x128xf32>, vector<8x128xf32> -> vector<8x128xf32>
    %35 = math.rsqrt %34 : vector<8x128xf32>
    %cst_14 = arith.constant 1.000000e-01 : f32
    %36 = vector.broadcast %cst_14 : f32 to vector<8x128xf32>
    %37 = arith.mulf %36, %35 : vector<8x128xf32>
    %38 = arith.mulf %32, %37 : vector<8x128xf32>
    %39 = tpu.concatenate %0, %0, %0, %0 in 1 : vector<8x32xf32>, vector<8x32xf32>, vector<8x32xf32>, vector<8x32xf32> -> vector<8x128xf32>
    %40 = arith.addf %39, %38 : vector<8x128xf32>
    %c0_15 = arith.constant 0 : index
    %c0_16 = arith.constant 0 : index
    %41 = vector.load %arg3[%c0_15, %c0_16] : memref<8x128xf32, #tpu.memory_space<vmem>>, vector<8x128xf32>
    tpu.vector_store %arg3[%c0_15, %c0_16], %40 {strides = array<i32>} : memref<8x128xf32, #tpu.memory_space<vmem>>, vector<8x128xf32>,
    return
  }
  func.func @transform_0(%arg0: i32) -> (i32, i32) {
    %c0_i32 = arith.constant 0 : i32
    %c0_i32_0 = arith.constant 0 : i32
    %c0_i32_1 = arith.constant 0 : i32
    return %c0_i32, %c0_i32_0 : i32, i32
  }
  func.func @transform_1(%arg0: i32) -> (i32, i32) {
    %c0_i32 = arith.constant 0 : i32
    %c0_i32_0 = arith.constant 0 : i32
    %c0_i32_1 = arith.constant 0 : i32
    return %c0_i32, %c0_i32_0 : i32, i32
  }
  func.func @transform_2(%arg0: i32) -> (i32, i32) {
    %c0_i32 = arith.constant 0 : i32
    %c0_i32_0 = arith.constant 0 : i32
    %c0_i32_1 = arith.constant 0 : i32
    return %c0_i32, %c0_i32_0 : i32, i32
  }
}

</mosaic_0001>

<llo_original>
// kernel: direction_model_packed.1
$region0: #{direction_model_packed.1}
  #allocation0 [shape = 'u32[]', space=smem, size = 0x4, offset = 0x4, fixed_abs, tag = 'smem constant byte address 0x4 - core index']
  #allocation1 [shape = 'u32[144,128]{1,0:T(1,128)}', space=vmem, size = 0x12000, scoped, tag = 'internal scratch']
  %s0 = inlined_call_operand.hbm [shape: f32[8,32], index: 0, kind: input, shape index: {}]
  %s1 = inlined_call_operand.hbm [shape: f32[296,128], index: 1, kind: input, shape index: {}]
  %s2 = inlined_call_operand.vmem [shape: f32[8,128], index: 2, kind: output, shape index: {}]
  %s3 = sld [smem:[#allocation0]]
  $region26: #{direction_model_packed.1} parent=0
    _
  %s5 = ssub.s32 1, %s3
  %s6 = scalar_select 0, %s5, %s3
  $region1: #{direction_model_packed.1} parent=0
    #allocation2 [shape = 'u8[4096]{0}', space=vmem, size = 0x1000, scoped, tag = 'input window, operand 0, single buffered']
    #allocation3 [shape = 's32[1]{0}', space=sflag, size = 0x4, scoped, tag = 'scoped memory for direction_model_packed.1']
    #allocation4 [shape = 'u8[151552]{0}', space=vmem, size = 0x25000, scoped, tag = 'input window, operand 1, single buffered']
    #allocation5 [shape = 's32[1]{0}', space=sflag, size = 0x4, scoped, tag = 'scoped memory for direction_model_packed.1']
    %7 = vsyncpa [#allocation3], 0
    %8 = vsyncpa [#allocation5], 0
    // Predicated region
    $region2: #{direction_model_packed.1} parent=1 // pred_check
      _
    $region3: #{direction_model_packed.1} parent=1 // pred_check_branch
      %10 = sbr.rel (0) target = $region5
    $region4: #{direction_model_packed.1} parent=1 // pred_region
      %s12 = ssub.s32 128, 128
      %13 = vsyncadd [#allocation3], %s12
      %s15 = sshll.u32 [#allocation2], 4
      %s16 = int_to_ptr.vmem [resolvable:$true] %s15
      %18 = dma.hbm_to_vmem [thread:$0]  %s0, 128, %s16, [#allocation3]
    $region5: #{direction_model_packed.1} parent=1 // pred_fallthru
      _
    // Predicated region
    $region6: #{direction_model_packed.1} parent=1 // pred_check
      _
    $region7: #{direction_model_packed.1} parent=1 // pred_check_branch
      %20 = sbr.rel (0) target = $region9
    $region8: #{direction_model_packed.1} parent=1 // pred_region
      %s22 = ssub.s32 4736, 4736
      %23 = vsyncadd [#allocation5], %s22
      %s24 = sshll.u32 [#allocation4], 4
      %s25 = int_to_ptr.vmem [resolvable:$true] %s24
      %30 = dma.hbm_to_vmem [thread:$0]  %s1, 4736, %s25, [#allocation5], 128, 128, 8
    $region9: #{direction_model_packed.1} parent=1 // pred_fallthru
      _
    // Predicated region
    $region10: #{direction_model_packed.1} parent=1 // pred_check
      _
    $region11: #{direction_model_packed.1} parent=1 // pred_check_branch
      %32 = sbr.rel (0) target = $region13
    $region12: #{direction_model_packed.1} parent=1 // pred_region
      %33 = dma.done [#allocation3], 128
    $region13: #{direction_model_packed.1} parent=1 // pred_fallthru
      _
    // Predicated region
    $region14: #{direction_model_packed.1} parent=1 // pred_check
      _
    $region15: #{direction_model_packed.1} parent=1 // pred_check_branch
      %35 = sbr.rel (0) target = $region17
    $region16: #{direction_model_packed.1} parent=1 // pred_region
      %36 = dma.done [#allocation5], 4736
    $region17: #{direction_model_packed.1} parent=1 // pred_fallthru
      _
    %v37 = vld [vmem:[#allocation2] sm:$0xff]
    %v38 = vld [vmem:[#allocation4] sm:$0xff]
    %v39 = vld [vmem:[#allocation4 + $0x8] sm:$0xff]
    %v40 = vld [vmem:[#allocation4 + $0x10] sm:$0xff]
    %v41 = vld [vmem:[#allocation4 + $0x18] sm:$0xff]
    %v42 = vld [vmem:[#allocation4 + $0x20] sm:$0xff]
    %v43 = vld [vmem:[#allocation4 + $0x28] sm:$0xff]
    %v44 = vld [vmem:[#allocation4 + $0x30] sm:$0xff]
    %v45 = vld [vmem:[#allocation4 + $0x38] sm:$0xff]
    %v46 = vld [vmem:[#allocation4 + $0x40] sm:$0xff]
    %v47 = vld [vmem:[#allocation4 + $0x48] sm:$0xff]
    %v48 = vld [vmem:[#allocation4 + $0x50] sm:$0xff]
    %v49 = vld [vmem:[#allocation4 + $0x58] sm:$0xff]
    %v50 = vld [vmem:[#allocation4 + $0x60] sm:$0xff]
    %v51 = vld [vmem:[#allocation4 + $0x68] sm:$0xff]
    %v52 = vld [vmem:[#allocation4 + $0x70] sm:$0xff]
    %v53 = vld [vmem:[#allocation4 + $0x78] sm:$0xff]
    %v54 = vld [vmem:[#allocation4 + $0x80] sm:$0xff]
    %v55 = vld [vmem:[#allocation4 + $0x88] sm:$0xff]
    %v56 = vld [vmem:[#allocation4 + $0x90] sm:$0xff]
    %v57 = vld [vmem:[#allocation4 + $0x98] sm:$0xff]
    %v58 = vld [vmem:[#allocation4 + $0xa0] sm:$0xff]
    %v59 = vld [vmem:[#allocation4 + $0xa8] sm:$0xff]
    %v60 = vld [vmem:[#allocation4 + $0xb0] sm:$0xff]
    %v61 = vld [vmem:[#allocation4 + $0xb8] sm:$0xff]
    %v62 = vld [vmem:[#allocation4 + $0xc0] sm:$0xff]
    %v63 = vld [vmem:[#allocation4 + $0xc8] sm:$0xff]
    %v64 = vld [vmem:[#allocation4 + $0xd0] sm:$0xff]
    %v65 = vld [vmem:[#allocation4 + $0xd8] sm:$0xff]
    %v66 = vld [vmem:[#allocation4 + $0xe0] sm:$0xff]
    %v67 = vld [vmem:[#allocation4 + $0xe8] sm:$0xff]
    %v68 = vld [vmem:[#allocation4 + $0xf0] sm:$0xff]
    %v69 = vld [vmem:[#allocation4 + $0xf8] sm:$0xff]
    %v70 = vld [vmem:[#allocation4 + $0x100] sm:$0xff]
    %v71 = vld [vmem:[#allocation4 + $0x108] sm:$0xff]
    %v72 = vld [vmem:[#allocation4 + $0x110] sm:$0xff]
    %v73 = vld [vmem:[#allocation4 + $0x118] sm:$0xff]
    %v74 = vld [vmem:[#allocation4 + $0x120] sm:$0xff]
    %v75 = vlaneseq
    %v76 = vshrl.u32 %v75, 7
    %v77 = vsub.s32 0, %v76
    %v78 = vrot.slane %v42, %v77
    %vm79 = vcmask 261120
    %v81 = vsel %vm79, %v37, 0
    %83 = vmatprep.subr.mxu0 0.0
    %84 = vmatpush1.msra.mxu0 0.0
    %85 = vmatprep.subr.mxu0 0.0
    %86 = vmatpush1.msra.mxu0 0.0
    %87 = vmatprep.subr.mxu0 0.0
    %88 = vmatpush1.msra.mxu0 0.0
    %89 = vmatprep.subr.mxu0 0.0
    %90 = vmatpush1.msra.mxu0 0.0
    %91 = vmatprep.subr.mxu0 0.0
    %92 = vmatpush1.msra.mxu0 0.0
    %93 = vmatprep.subr.mxu0 0.0
    %94 = vmatpush1.msra.mxu0 0.0
    %95 = vmatprep.subr.mxu0 0.0
    %96 = vmatpush1.msra.mxu0 0.0
    %97 = vmatprep.subr.mxu0 0.0
    %98 = vmatpush1.msra.mxu0 0.0
    %99 = vmatprep.subr.mxu0 0.0
    %100 = vmatpush1.msra.mxu0 0.0
    %101 = vmatprep.subr.mxu0 0.0
    %102 = vmatpush1.msra.mxu0 0.0
    %103 = vmatprep.subr.mxu0 0.0
    %104 = vmatpush1.msra.mxu0 0.0
    %105 = vmatprep.subr.mxu0 0.0
    %106 = vmatpush1.msra.mxu0 0.0
    %107 = vmatprep.subr.mxu0 0.0
    %108 = vmatpush1.msra.mxu0 %v41
    %109 = vmatprep.subr.mxu0 0.0
    %110 = vmatpush1.msra.mxu0 %v40
    %111 = vmatprep.subr.mxu0 0.0
    %112 = vmatpush1.msra.mxu0 %v39
    %113 = vmatprep.subr.mxu0 0.0
    %114 = vmatpush1.msra.mxu0 %v38
    %115 = vmatprep.subr.mxu0 0.0
    %116 = vmatpush2.msra.mxu0 0.0
    %117 = vmatprep.subr.mxu0 0.0
    %118 = vmatpush2.msra.mxu0 0.0
    %119 = vmatprep.subr.mxu0 0.0
    %120 = vmatpush2.msra.mxu0 0.0
    %121 = vmatprep.subr.mxu0 0.0
    %122 = vmatpush2.msra.mxu0 0.0
    %123 = vmatprep.subr.mxu0 0.0
    %124 = vmatpush2.msra.mxu0 0.0
    %125 = vmatprep.subr.mxu0 0.0
    %126 = vmatpush2.msra.mxu0 0.0
    %127 = vmatprep.subr.mxu0 0.0
    %128 = vmatpush2.msra.mxu0 0.0
    %129 = vmatprep.subr.mxu0 0.0
    %130 = vmatpush2.msra.mxu0 0.0
    %131 = vmatprep.subr.mxu0 0.0
    %132 = vmatpush2.msra.mxu0 0.0
    %133 = vmatprep.subr.mxu0 0.0
    %134 = vmatpush2.msra.mxu0 0.0
    %135 = vmatprep.subr.mxu0 0.0
    %136 = vmatpush2.msra.mxu0 0.0
    %137 = vmatprep.subr.mxu0 0.0
    %138 = vmatpush2.msra.mxu0 0.0
    %139 = vmatprep.subr.mxu0 0.0
    %140 = vmatpush2.msra.mxu0 0.0
    %141 = vmatprep.subr.mxu0 0.0
    %142 = vmatpush2.msra.mxu0 0.0
    %143 = vmatprep.subr.mxu0 0.0
    %144 = vmatpush2.msra.mxu0 0.0
    %145 = vmatprep.subr.mxu0 0.0
    %146 = vmatpush2.msra.mxu0 0.0
    %147 = vmatprep.mubr.f32.mxu0 0.0
    %148 = vmatmul.mubr.f32.gmra.mxu0 %v81
    %v149 = vpop.f32.mrf.mxu0
    %v150 = vadd.f32 %v78, %v149
    %v151 = vpop.f32.mrf.mxu0
    %152 = vdwg.mxu0
    %v153 = vrot.slane %v150, 4
    %v154 = vadd.f32 %v150, %v153
    %v155 = vrot.slane %v154, 2
    %v156 = vadd.f32 %v154, %v155
    %v157 = vrot.slane %v156, 1
    %v158 = vadd.f32 %v156, %v157
    %v159 = vrcp.pop 8.0
    %v160 = vmul.f32 %v158, %v159
    %v161 = vsub.f32 %v150, %v160
    %v162 = vmul.f32 %v161, %v161
    %v163 = vrot.slane %v162, 4
    %v164 = vadd.f32 %v162, %v163
    %v165 = vrot.slane %v164, 2
    %v166 = vadd.f32 %v164, %v165
    %v167 = vrot.slane %v166, 1
    %v168 = vadd.f32 %v166, %v167
    %v169 = vmul.f32 %v168, %v159
    %v170 = vadd.f32 %v169, 1e-05
    %v171 = vrsqrt.pop %v170
    %v172 = vmul.f32 %v42, %v171
    %v173 = vlaneseq
    %v174 = vshrl.u32 %v173, 7
    %v175 = vsub.s32 1, %v174
    %v176 = vrot.slane %v172, %v175
    %v177 = vmul.f32 %v161, %v176
    %v178 = vlaneseq
    %v179 = vshrl.u32 %v178, 7
    %v180 = vsub.s32 2, %v179
    %v181 = vrot.slane %v42, %v180
    %v182 = vadd.f32 %v177, %v181
    %v183 = vmax.f32 %v182, 0.0
    %184 = vmatprep.subr.mxu0 0.0
    %185 = vmatpush1.msra.mxu0 %v58
    %186 = vmatprep.subr.mxu0 0.0
    %187 = vmatpush1.msra.mxu0 %v57
    %188 = vmatprep.subr.mxu0 0.0
    %189 = vmatpush1.msra.mxu0 %v56
    %190 = vmatprep.subr.mxu0 0.0
    %191 = vmatpush1.msra.mxu0 %v55
    %192 = vmatprep.subr.mxu0 0.0
    %193 = vmatpush1.msra.mxu0 %v54
    %194 = vmatprep.subr.mxu0 0.0
    %195 = vmatpush1.msra.mxu0 %v53
    %196 = vmatprep.subr.mxu0 0.0
    %197 = vmatpush1.msra.mxu0 %v52
    %198 = vmatprep.subr.mxu0 0.0
    %199 = vmatpush1.msra.mxu0 %v51
    %200 = vmatprep.subr.mxu0 0.0
    %201 = vmatpush1.msra.mxu0 %v50
    %202 = vmatprep.subr.mxu0 0.0
    %203 = vmatpush1.msra.mxu0 %v49
    %204 = vmatprep.subr.mxu0 0.0
    %205 = vmatpush1.msra.mxu0 %v48
    %206 = vmatprep.subr.mxu0 0.0
    %207 = vmatpush1.msra.mxu0 %v47
    %208 = vmatprep.subr.mxu0 0.0
    %209 = vmatpush1.msra.mxu0 %v46
    %210 = vmatprep.subr.mxu0 0.0
    %211 = vmatpush1.msra.mxu0 %v45
    %212 = vmatprep.subr.mxu0 0.0
    %213 = vmatpush1.msra.mxu0 %v44
    %214 = vmatprep.subr.mxu0 0.0
    %215 = vmatpush1.msra.mxu0 %v43
    %216 = vmatprep.subr.mxu0 0.0
    %217 = vmatpush2.msra.mxu0 0.0
    %218 = vmatprep.subr.mxu0 0.0
    %219 = vmatpush2.msra.mxu0 0.0
    %220 = vmatprep.subr.mxu0 0.0
    %221 = vmatpush2.msra.mxu0 0.0
    %222 = vmatprep.subr.mxu0 0.0
    %223 = vmatpush2.msra.mxu0 0.0
    %224 = vmatprep.subr.mxu0 0.0
    %225 = vmatpush2.msra.mxu0 0.0
    %226 = vmatprep.subr.mxu0 0.0
    %227 = vmatpush2.msra.mxu0 0.0
    %228 = vmatprep.subr.mxu0 0.0
    %229 = vmatpush2.msra.mxu0 0.0
    %230 = vmatprep.subr.mxu0 0.0
    %231 = vmatpush2.msra.mxu0 0.0
    %232 = vmatprep.subr.mxu0 0.0
    %233 = vmatpush2.msra.mxu0 0.0
    %234 = vmatprep.subr.mxu0 0.0
    %235 = vmatpush2.msra.mxu0 0.0
    %236 = vmatprep.subr.mxu0 0.0
    %237 = vmatpush2.msra.mxu0 0.0
    %238 = vmatprep.subr.mxu0 0.0
    %239 = vmatpush2.msra.mxu0 0.0
    %240 = vmatprep.subr.mxu0 0.0
    %241 = vmatpush2.msra.mxu0 0.0
    %242 = vmatprep.subr.mxu0 0.0
    %243 = vmatpush2.msra.mxu0 0.0
    %244 = vmatprep.subr.mxu0 0.0
    %245 = vmatpush2.msra.mxu0 0.0
    %246 = vmatprep.subr.mxu0 0.0
    %247 = vmatpush2.msra.mxu0 0.0
    %248 = vmatprep.mubr.f32.mxu0 0.0
    %249 = vmatmul.mubr.f32.gmra.mxu0 %v183
    %v250 = vpop.f32.mrf.mxu0
    %v251 = vadd.f32 0.0, %v250
    %v252 = vpop.f32.mrf.mxu0
    %253 = vdwg.mxu0
    %v254 = vmul.f32 %v251, %v251
    %255 = vmatprep.subr.mxu0 0.0
    %256 = vmatpush1.msra.mxu0 %v74
    %257 = vmatprep.subr.mxu0 0.0
    %258 = vmatpush1.msra.mxu0 %v73
    %259 = vmatprep.subr.mxu0 0.0
    %260 = vmatpush1.msra.mxu0 %v72
    %261 = vmatprep.subr.mxu0 0.0
    %262 = vmatpush1.msra.mxu0 %v71
    %263 = vmatprep.subr.mxu0 0.0
    %264 = vmatpush1.msra.mxu0 %v70
    %265 = vmatprep.subr.mxu0 0.0
    %266 = vmatpush1.msra.mxu0 %v69
    %267 = vmatprep.subr.mxu0 0.0
    %268 = vmatpush1.msra.mxu0 %v68
    %269 = vmatprep.subr.mxu0 0.0
    %270 = vmatpush1.msra.mxu0 %v67
    %271 = vmatprep.subr.mxu0 0.0
    %272 = vmatpush1.msra.mxu0 %v66
    %273 = vmatprep.subr.mxu0 0.0
    %274 = vmatpush1.msra.mxu0 %v65
    %275 = vmatprep.subr.mxu0 0.0
    %276 = vmatpush1.msra.mxu0 %v64
    %277 = vmatprep.subr.mxu0 0.0
    %278 = vmatpush1.msra.mxu0 %v63
    %279 = vmatprep.subr.mxu0 0.0
    %280 = vmatpush1.msra.mxu0 %v62
    %281 = vmatprep.subr.mxu0 0.0
    %282 = vmatpush1.msra.mxu0 %v61
    %283 = vmatprep.subr.mxu0 0.0
    %284 = vmatpush1.msra.mxu0 %v60
    %285 = vmatprep.subr.mxu0 0.0
    %286 = vmatpush1.msra.mxu0 %v59
    %287 = vmatprep.subr.mxu0 0.0
    %288 = vmatpush2.msra.mxu0 0.0
    %289 = vmatprep.subr.mxu0 0.0
    %290 = vmatpush2.msra.mxu0 0.0
    %291 = vmatprep.subr.mxu0 0.0
    %292 = vmatpush2.msra.mxu0 0.0
    %293 = vmatprep.subr.mxu0 0.0
    %294 = vmatpush2.msra.mxu0 0.0
    %295 = vmatprep.subr.mxu0 0.0
    %296 = vmatpush2.msra.mxu0 0.0
    %297 = vmatprep.subr.mxu0 0.0
    %298 = vmatpush2.msra.mxu0 0.0
    %299 = vmatprep.subr.mxu0 0.0
    %300 = vmatpush2.msra.mxu0 0.0
    %301 = vmatprep.subr.mxu0 0.0
    %302 = vmatpush2.msra.mxu0 0.0
    %303 = vmatprep.subr.mxu0 0.0
    %304 = vmatpush2.msra.mxu0 0.0
    %305 = vmatprep.subr.mxu0 0.0
    %306 = vmatpush2.msra.mxu0 0.0
    %307 = vmatprep.subr.mxu0 0.0
    %308 = vmatpush2.msra.mxu0 0.0
    %309 = vmatprep.subr.mxu0 0.0
    %310 = vmatpush2.msra.mxu0 0.0
    %311 = vmatprep.subr.mxu0 0.0
    %312 = vmatpush2.msra.mxu0 0.0
    %313 = vmatprep.subr.mxu0 0.0
    %314 = vmatpush2.msra.mxu0 0.0
    %315 = vmatprep.subr.mxu0 0.0
    %316 = vmatpush2.msra.mxu0 0.0
    %317 = vmatprep.subr.mxu0 0.0
    %318 = vmatpush2.msra.mxu0 0.0
    %319 = vmatprep.mubr.f32.mxu0 0.0
    %320 = vmatmul.mubr.f32.gmra.mxu0 %v254
    %v321 = vpop.f32.mrf.mxu0
    %v322 = vadd.f32 0.0, %v321
    %v323 = vpop.f32.mrf.mxu0
    %324 = vdwg.mxu0
    %v325 = vrsqrt.pop %v322
    %v326 = vmul.f32 %v325, 0.1
    %v327 = vmul.f32 %v251, %v326
    %328 = vrot.lane.b32.xlu0 %v37, 32
    %v329 = vpop.permute.xlu0 %328
    %331 = vrot.lane.b32.xlu0 %v37, 64
    %v332 = vpop.permute.xlu0 %331
    %334 = vrot.lane.b32.xlu0 %v37, 96
    %v335 = vpop.permute.xlu0 %334
    %v337 = vsel %vm79, %v37, %v329
    %vm338 = vcmask 523264
    %v339 = vsel %vm338, %v337, %v332
    %vm340 = vcmask 785408
    %v341 = vsel %vm340, %v339, %v335
    %v342 = vadd.f32 %v341, %v327
    %343 = vst [vmem:[%s2] sm:$0xff] %v342
    // Predicated region
    $region18: #{direction_model_packed.1} parent=1 // pred_check
      _
    $region19: #{direction_model_packed.1} parent=1 // pred_check_branch
      %345 = sbr.rel (0) target = $region21
    $region20: #{direction_model_packed.1} parent=1 // pred_region
      _
    $region21: #{direction_model_packed.1} parent=1 // pred_fallthru
      _
    // Predicated region
    $region22: #{direction_model_packed.1} parent=1 // pred_check
      _
    $region23: #{direction_model_packed.1} parent=1 // pred_check_branch
      %347 = sbr.rel (0) target = $region25
    $region24: #{direction_model_packed.1} parent=1 // pred_region
      _
    $region25: #{direction_model_packed.1} parent=1 // pred_fallthru
      _
    %348 = vsyncpa [#allocation3], 1
    %349 = vsyncpa [#allocation5], 1

</llo_original>
